<compile_context>
chip_gen: v7x
topology: tpu7x:2x2x1
jax: 0.10.0
libtpu: 0.0.40
codegen_flags: <defaults>
</compile_context>

<pallas_src>
import jax
import jax.numpy as jnp
from jax.experimental import pallas as pl
from jax.experimental.pallas import tpu as pltpu


def _make_mix_kernel(B):
    """Builds the kernel body for a fixed per-step sample count B."""

    def _mix_kernel(idx_ref, x_ref, lam_ref, xs_hbm, o_ref, gbuf, sems):
        # idx_ref : (N_pad,) int32 in SMEM (scalar-prefetched permutation)
        # x_ref   : (B, CHW) VMEM block of contiguous samples [i*B, i*B+B)
        # lam_ref : (B, 1)   VMEM block of per-sample mixing coefficients
        # xs_hbm  : (N_pad, CHW) raw HBM ref (gather source, memory_space=ANY)
        # o_ref   : (B, CHW) VMEM output block
        # gbuf    : (B, CHW) VMEM scratch holding the gathered permuted rows
        # sems    : (B,) DMA semaphores, one per gathered row
        i = pl.program_id(0)
        base = i * B

        # Kick off all B row gathers: xs[index[base + b]] -> gbuf[b].
        for b in range(B):
            row = idx_ref[base + b]
            pltpu.make_async_copy(
                xs_hbm.at[pl.ds(row, 1)], gbuf.at[pl.ds(b, 1)], sems.at[b]
            ).start()

        # Wait for the gathers (the BlockSpec pipeline keeps prefetching the
        # next contiguous block / writing back the previous output meanwhile).
        for b in range(B):
            pltpu.make_async_copy(
                xs_hbm.at[pl.ds(0, 1)], gbuf.at[pl.ds(b, 1)], sems.at[b]
            ).wait()

        # Lerp in f32, cast on store.
        lam = lam_ref[...].astype(jnp.float32)          # (B, 1)
        x = x_ref[...].astype(jnp.float32)              # (B, CHW)
        xp = gbuf[...].astype(jnp.float32)              # (B, CHW)
        o_ref[...] = ((1.0 - lam) * x + lam * xp).astype(o_ref.dtype)

    return _mix_kernel


def aug_module_forward(xs, lam, y, index, *, block_batch=None):
    """Pallas equivalent of AugModule.forward.

    xs:    (N, C, H, W) float
    lam:   (N,)          float (per-sample mixing coefficient)
    y:     (N,)          int32 (labels)
    index: (N,)          int32 (batch permutation)

    Returns (x_mix, y_a, y_b) matching the PyTorch semantics.
    """
    N, C, H, W = xs.shape
    chw = C * H * W
    dtype = xs.dtype

    index = index.astype(jnp.int32)
    lam_2d = lam.astype(jnp.float32).reshape(N, 1)
    xs_flat = xs.reshape(N, chw)                      # lane-dense layout

    # Pick samples-per-step B: big enough to amortize the ~0.35us fixed
    # per-step cost (~0.5 MiB of gathered bytes per step), small enough to
    # keep the unrolled DMA count and VMEM footprint modest on v7x.
    if block_batch is None:
        row_bytes = chw * xs.dtype.itemsize
        B = max(8, min(32, pl.cdiv(512 * 1024, row_bytes)))
    else:
        B = int(block_batch)
    if B >= N:
        B = N                                   # one block covers the batch
    else:
        B = max(8, (B // 8) * 8)                # sublane-aligned block height

    # Pad the batch to a multiple of B (padded rows gather row 0 with lam=0
    # and are sliced off afterwards).
    N_pad = pl.cdiv(N, B) * B
    if N_pad != N:
        pad = N_pad - N
        xs_flat = jnp.concatenate(
            [xs_flat, jnp.zeros((pad, chw), dtype)], axis=0)
        lam_2d = jnp.concatenate(
            [lam_2d, jnp.zeros((pad, 1), jnp.float32)], axis=0)
        index_pad = jnp.concatenate(
            [index, jnp.zeros((pad,), jnp.int32)], axis=0)
    else:
        index_pad = index

    grid_spec = pltpu.PrefetchScalarGridSpec(
        num_scalar_prefetch=1,                  # the permutation -> SMEM
        grid=(N_pad // B,),
        in_specs=[
            # contiguous x rows [i*B, (i+1)*B)
            pl.BlockSpec((B, chw), lambda i, idx: (i, 0)),
            # per-sample lam column
            pl.BlockSpec((B, 1), lambda i, idx: (i, 0)),
            # full array left in HBM; gathered manually inside the kernel
            pl.BlockSpec(memory_space=pl.ANY),
        ],
        out_specs=pl.BlockSpec((B, chw), lambda i, idx: (i, 0)),
        scratch_shapes=[
            pltpu.VMEM((B, chw), dtype),        # gathered permuted rows
            pltpu.SemaphoreType.DMA((B,)),      # one DMA sem per row
        ],
    )

    x_mix_flat = pl.pallas_call(
        _make_mix_kernel(B),
        out_shape=jax.ShapeDtypeStruct((N_pad, chw), dtype),
        grid_spec=grid_spec,
        compiler_params=pltpu.CompilerParams(
            dimension_semantics=("parallel",),  # distinct output block/step
        ),
    )(index_pad, xs_flat, lam_2d, xs_flat)

    x_mix = x_mix_flat[:N].reshape(N, C, H, W)

    # Label bookkeeping is glue (tiny 1-D gather), kept in plain JAX.
    y_a = y
    y_b = y[index]
    return x_mix, y_a, y_b


if __name__ == "__main__":
    key = jax.random.PRNGKey(0)
    k_x, k_lam, k_y, k_perm = jax.random.split(key, 4)

    N, C, H, W = 12, 3, 16, 16
    xs = jax.random.normal(k_x, (N, C, H, W), dtype=jnp.float32)
    lam = jax.random.uniform(k_lam, (N,), dtype=jnp.float32)
    y = jax.random.randint(k_y, (N,), 0, 100, dtype=jnp.int32)
    index = jax.random.permutation(k_perm, N).astype(jnp.int32)

    # Reference (pure JAX) forward semantics.
    lam_b = lam.reshape(N, 1, 1, 1)
    x_mix_ref = (1.0 - lam_b) * xs + lam_b * xs[index]

    # Multi-step grid: B=8 -> grid of 2 steps, exercises batch padding 12->16.
    x_mix, y_a, y_b = aug_module_forward(xs, lam, y, index, block_batch=8)
    jax.block_until_ready((x_mix, y_a, y_b))
    assert jnp.allclose(x_mix, x_mix_ref, atol=1e-6, rtol=1e-6)
    assert jnp.array_equal(y_a, y)
    assert jnp.array_equal(y_b, y[index])

    # Auto block size: single (N, CHW) block, grid of 1.
    x_mix2, _, _ = aug_module_forward(xs, lam, y, index)
    jax.block_until_ready(x_mix2)
    assert jnp.allclose(x_mix2, x_mix_ref, atol=1e-6, rtol=1e-6)

    print("KERNEL_OK")
</pallas_src>

<mosaic_0001>
module attributes {stable_mosaic.version = 11 : i64} {
  func.func @_mix_kernel(%arg0: i32, %arg1: memref<16xi32, #tpu.memory_space<smem>>, %arg2: memref<8x768xf32, #tpu.memory_space<vmem>>, %arg3: memref<8x1xf32, #tpu.memory_space<vmem>>, %arg4: memref<16x768xf32, #tpu.memory_space<any>>, %arg5: memref<8x768xf32, #tpu.memory_space<vmem>>, %arg6: memref<8x768xf32, #tpu.memory_space<vmem>>, %arg7: memref<8x!tpu.dma_semaphore, #tpu.memory_space<semaphore_mem>>) attributes {dimension_semantics = [#tpu.dimension_semantics<parallel>], iteration_bounds = array<i64: 2>, scalar_prefetch = 1 : i64, scratch_operands = 2 : i64, tpu.core_type = #tpu.core_type<tc>, window_params = [{transform_indices = @transform_0, window_bounds = array<i64: 8, 768>}, {transform_indices = @transform_1, window_bounds = array<i64: 8, 1>}, {}, {transform_indices = @transform_3, window_bounds = array<i64: 8, 768>}]} {
    %c8_i32 = arith.constant 8 : i32
    %0 = arith.muli %arg0, %c8_i32 : i32
    %c0_i32 = arith.constant 0 : i32
    %1 = arith.addi %0, %c0_i32 : i32
    %2 = arith.index_cast %1 : i32 to index
    %3 = memref.load %arg1[%2] : memref<16xi32, #tpu.memory_space<smem>>
    %c0_i32_0 = arith.constant 0 : i32
    %c0_i32_1 = arith.constant 0 : i32
    %4 = tpu.memref_slice %arg4[%3, %c0_i32_1] : memref<16x768xf32, #tpu.memory_space<any>> -> memref<1x768xf32, #tpu.memory_space<any>>
    %c0_i32_2 = arith.constant 0 : i32
    %c0_i32_3 = arith.constant 0 : i32
    %5 = tpu.memref_slice %arg6[%c0_i32_2, %c0_i32_3] : memref<8x768xf32, #tpu.memory_space<vmem>> -> memref<1x768xf32, #tpu.memory_space<vmem>>
    %6 = tpu.memref_slice %arg7[%c0_i32_0] : memref<8x!tpu.dma_semaphore, #tpu.memory_space<semaphore_mem>> -> memref<1x!tpu.dma_semaphore, #tpu.memory_space<semaphore_mem>>
    %7 = tpu.memref_squeeze %6 : memref<1x!tpu.dma_semaphore, #tpu.memory_space<semaphore_mem>> -> memref<!tpu.dma_semaphore, #tpu.memory_space<semaphore_mem>>
    tpu.enqueue_dma source(%4 : memref<1x768xf32, #tpu.memory_space<any>>) target(%5 : memref<1x768xf32, #tpu.memory_space<vmem>>) target_semaphore(%7 : memref<!tpu.dma_semaphore, #tpu.memory_space<semaphore_mem>>)
    %c1_i32 = arith.constant 1 : i32
    %8 = arith.addi %0, %c1_i32 : i32
    %9 = arith.index_cast %8 : i32 to index
    %10 = memref.load %arg1[%9] : memref<16xi32, #tpu.memory_space<smem>>
    %c1_i32_4 = arith.constant 1 : i32
    %c0_i32_5 = arith.constant 0 : i32
    %11 = tpu.memref_slice %arg4[%10, %c0_i32_5] : memref<16x768xf32, #tpu.memory_space<any>> -> memref<1x768xf32, #tpu.memory_space<any>>
    %c1_i32_6 = arith.constant 1 : i32
    %c0_i32_7 = arith.constant 0 : i32
    %12 = tpu.memref_slice %arg6[%c1_i32_6, %c0_i32_7] : memref<8x768xf32, #tpu.memory_space<vmem>> -> memref<1x768xf32, #tpu.memory_space<vmem>>
    %13 = tpu.memref_slice %arg7[%c1_i32_4] : memref<8x!tpu.dma_semaphore, #tpu.memory_space<semaphore_mem>> -> memref<1x!tpu.dma_semaphore, #tpu.memory_space<semaphore_mem>>
    %14 = tpu.memref_squeeze %13 : memref<1x!tpu.dma_semaphore, #tpu.memory_space<semaphore_mem>> -> memref<!tpu.dma_semaphore, #tpu.memory_space<semaphore_mem>>
    tpu.enqueue_dma source(%11 : memref<1x768xf32, #tpu.memory_space<any>>) target(%12 : memref<1x768xf32, #tpu.memory_space<vmem>>) target_semaphore(%14 : memref<!tpu.dma_semaphore, #tpu.memory_space<semaphore_mem>>)
    %c2_i32 = arith.constant 2 : i32
    %15 = arith.addi %0, %c2_i32 : i32
    %16 = arith.index_cast %15 : i32 to index
    %17 = memref.load %arg1[%16] : memref<16xi32, #tpu.memory_space<smem>>
    %c2_i32_8 = arith.constant 2 : i32
    %c0_i32_9 = arith.constant 0 : i32
    %18 = tpu.memref_slice %arg4[%17, %c0_i32_9] : memref<16x768xf32, #tpu.memory_space<any>> -> memref<1x768xf32, #tpu.memory_space<any>>
    %c2_i32_10 = arith.constant 2 : i32
    %c0_i32_11 = arith.constant 0 : i32
    %19 = tpu.memref_slice %arg6[%c2_i32_10, %c0_i32_11] : memref<8x768xf32, #tpu.memory_space<vmem>> -> memref<1x768xf32, #tpu.memory_space<vmem>>
    %20 = tpu.memref_slice %arg7[%c2_i32_8] : memref<8x!tpu.dma_semaphore, #tpu.memory_space<semaphore_mem>> -> memref<1x!tpu.dma_semaphore, #tpu.memory_space<semaphore_mem>>
    %21 = tpu.memref_squeeze %20 : memref<1x!tpu.dma_semaphore, #tpu.memory_space<semaphore_mem>> -> memref<!tpu.dma_semaphore, #tpu.memory_space<semaphore_mem>>
    tpu.enqueue_dma source(%18 : memref<1x768xf32, #tpu.memory_space<any>>) target(%19 : memref<1x768xf32, #tpu.memory_space<vmem>>) target_semaphore(%21 : memref<!tpu.dma_semaphore, #tpu.memory_space<semaphore_mem>>)
    %c3_i32 = arith.constant 3 : i32
    %22 = arith.addi %0, %c3_i32 : i32
    %23 = arith.index_cast %22 : i32 to index
    %24 = memref.load %arg1[%23] : memref<16xi32, #tpu.memory_space<smem>>
    %c3_i32_12 = arith.constant 3 : i32
    %c0_i32_13 = arith.constant 0 : i32
    %25 = tpu.memref_slice %arg4[%24, %c0_i32_13] : memref<16x768xf32, #tpu.memory_space<any>> -> memref<1x768xf32, #tpu.memory_space<any>>
    %c3_i32_14 = arith.constant 3 : i32
    %c0_i32_15 = arith.constant 0 : i32
    %26 = tpu.memref_slice %arg6[%c3_i32_14, %c0_i32_15] : memref<8x768xf32, #tpu.memory_space<vmem>> -> memref<1x768xf32, #tpu.memory_space<vmem>>
    %27 = tpu.memref_slice %arg7[%c3_i32_12] : memref<8x!tpu.dma_semaphore, #tpu.memory_space<semaphore_mem>> -> memref<1x!tpu.dma_semaphore, #tpu.memory_space<semaphore_mem>>
    %28 = tpu.memref_squeeze %27 : memref<1x!tpu.dma_semaphore, #tpu.memory_space<semaphore_mem>> -> memref<!tpu.dma_semaphore, #tpu.memory_space<semaphore_mem>>
    tpu.enqueue_dma source(%25 : memref<1x768xf32, #tpu.memory_space<any>>) target(%26 : memref<1x768xf32, #tpu.memory_space<vmem>>) target_semaphore(%28 : memref<!tpu.dma_semaphore, #tpu.memory_space<semaphore_mem>>)
    %c4_i32 = arith.constant 4 : i32
    %29 = arith.addi %0, %c4_i32 : i32
    %30 = arith.index_cast %29 : i32 to index
    %31 = memref.load %arg1[%30] : memref<16xi32, #tpu.memory_space<smem>>
    %c4_i32_16 = arith.constant 4 : i32
    %c0_i32_17 = arith.constant 0 : i32
    %32 = tpu.memref_slice %arg4[%31, %c0_i32_17] : memref<16x768xf32, #tpu.memory_space<any>> -> memref<1x768xf32, #tpu.memory_space<any>>
    %c4_i32_18 = arith.constant 4 : i32
    %c0_i32_19 = arith.constant 0 : i32
    %33 = tpu.memref_slice %arg6[%c4_i32_18, %c0_i32_19] : memref<8x768xf32, #tpu.memory_space<vmem>> -> memref<1x768xf32, #tpu.memory_space<vmem>>
    %34 = tpu.memref_slice %arg7[%c4_i32_16] : memref<8x!tpu.dma_semaphore, #tpu.memory_space<semaphore_mem>> -> memref<1x!tpu.dma_semaphore, #tpu.memory_space<semaphore_mem>>
    %35 = tpu.memref_squeeze %34 : memref<1x!tpu.dma_semaphore, #tpu.memory_space<semaphore_mem>> -> memref<!tpu.dma_semaphore, #tpu.memory_space<semaphore_mem>>
    tpu.enqueue_dma source(%32 : memref<1x768xf32, #tpu.memory_space<any>>) target(%33 : memref<1x768xf32, #tpu.memory_space<vmem>>) target_semaphore(%35 : memref<!tpu.dma_semaphore, #tpu.memory_space<semaphore_mem>>)
    %c5_i32 = arith.constant 5 : i32
    %36 = arith.addi %0, %c5_i32 : i32
    %37 = arith.index_cast %36 : i32 to index
    %38 = memref.load %arg1[%37] : memref<16xi32, #tpu.memory_space<smem>>
    %c5_i32_20 = arith.constant 5 : i32
    %c0_i32_21 = arith.constant 0 : i32
    %39 = tpu.memref_slice %arg4[%38, %c0_i32_21] : memref<16x768xf32, #tpu.memory_space<any>> -> memref<1x768xf32, #tpu.memory_space<any>>
    %c5_i32_22 = arith.constant 5 : i32
    %c0_i32_23 = arith.constant 0 : i32
    %40 = tpu.memref_slice %arg6[%c5_i32_22, %c0_i32_23] : memref<8x768xf32, #tpu.memory_space<vmem>> -> memref<1x768xf32, #tpu.memory_space<vmem>>
    %41 = tpu.memref_slice %arg7[%c5_i32_20] : memref<8x!tpu.dma_semaphore, #tpu.memory_space<semaphore_mem>> -> memref<1x!tpu.dma_semaphore, #tpu.memory_space<semaphore_mem>>
    %42 = tpu.memref_squeeze %41 : memref<1x!tpu.dma_semaphore, #tpu.memory_space<semaphore_mem>> -> memref<!tpu.dma_semaphore, #tpu.memory_space<semaphore_mem>>
    tpu.enqueue_dma source(%39 : memref<1x768xf32, #tpu.memory_space<any>>) target(%40 : memref<1x768xf32, #tpu.memory_space<vmem>>) target_semaphore(%42 : memref<!tpu.dma_semaphore, #tpu.memory_space<semaphore_mem>>)
    %c6_i32 = arith.constant 6 : i32
    %43 = arith.addi %0, %c6_i32 : i32
    %44 = arith.index_cast %43 : i32 to index
    %45 = memref.load %arg1[%44] : memref<16xi32, #tpu.memory_space<smem>>
    %c6_i32_24 = arith.constant 6 : i32
    %c0_i32_25 = arith.constant 0 : i32
    %46 = tpu.memref_slice %arg4[%45, %c0_i32_25] : memref<16x768xf32, #tpu.memory_space<any>> -> memref<1x768xf32, #tpu.memory_space<any>>
    %c6_i32_26 = arith.constant 6 : i32
    %c0_i32_27 = arith.constant 0 : i32
    %47 = tpu.memref_slice %arg6[%c6_i32_26, %c0_i32_27] : memref<8x768xf32, #tpu.memory_space<vmem>> -> memref<1x768xf32, #tpu.memory_space<vmem>>
    %48 = tpu.memref_slice %arg7[%c6_i32_24] : memref<8x!tpu.dma_semaphore, #tpu.memory_space<semaphore_mem>> -> memref<1x!tpu.dma_semaphore, #tpu.memory_space<semaphore_mem>>
    %49 = tpu.memref_squeeze %48 : memref<1x!tpu.dma_semaphore, #tpu.memory_space<semaphore_mem>> -> memref<!tpu.dma_semaphore, #tpu.memory_space<semaphore_mem>>
    tpu.enqueue_dma source(%46 : memref<1x768xf32, #tpu.memory_space<any>>) target(%47 : memref<1x768xf32, #tpu.memory_space<vmem>>) target_semaphore(%49 : memref<!tpu.dma_semaphore, #tpu.memory_space<semaphore_mem>>)
    %c7_i32 = arith.constant 7 : i32
    %50 = arith.addi %0, %c7_i32 : i32
    %51 = arith.index_cast %50 : i32 to index
    %52 = memref.load %arg1[%51] : memref<16xi32, #tpu.memory_space<smem>>
    %c7_i32_28 = arith.constant 7 : i32
    %c0_i32_29 = arith.constant 0 : i32
    %53 = tpu.memref_slice %arg4[%52, %c0_i32_29] : memref<16x768xf32, #tpu.memory_space<any>> -> memref<1x768xf32, #tpu.memory_space<any>>
    %c7_i32_30 = arith.constant 7 : i32
    %c0_i32_31 = arith.constant 0 : i32
    %54 = tpu.memref_slice %arg6[%c7_i32_30, %c0_i32_31] : memref<8x768xf32, #tpu.memory_space<vmem>> -> memref<1x768xf32, #tpu.memory_space<vmem>>
    %55 = tpu.memref_slice %arg7[%c7_i32_28] : memref<8x!tpu.dma_semaphore, #tpu.memory_space<semaphore_mem>> -> memref<1x!tpu.dma_semaphore, #tpu.memory_space<semaphore_mem>>
    %56 = tpu.memref_squeeze %55 : memref<1x!tpu.dma_semaphore, #tpu.memory_space<semaphore_mem>> -> memref<!tpu.dma_semaphore, #tpu.memory_space<semaphore_mem>>
    tpu.enqueue_dma source(%53 : memref<1x768xf32, #tpu.memory_space<any>>) target(%54 : memref<1x768xf32, #tpu.memory_space<vmem>>) target_semaphore(%56 : memref<!tpu.dma_semaphore, #tpu.memory_space<semaphore_mem>>)
    %c0_i32_32 = arith.constant 0 : i32
    %c0_i32_33 = arith.constant 0 : i32
    %c0_i32_34 = arith.constant 0 : i32
    %57 = tpu.memref_slice %arg4[%c0_i32_33, %c0_i32_34] : memref<16x768xf32, #tpu.memory_space<any>> -> memref<1x768xf32, #tpu.memory_space<any>>
    %c0_i32_35 = arith.constant 0 : i32
    %c0_i32_36 = arith.constant 0 : i32
    %58 = tpu.memref_slice %arg6[%c0_i32_35, %c0_i32_36] : memref<8x768xf32, #tpu.memory_space<vmem>> -> memref<1x768xf32, #tpu.memory_space<vmem>>
    %59 = tpu.memref_slice %arg7[%c0_i32_32] : memref<8x!tpu.dma_semaphore, #tpu.memory_space<semaphore_mem>> -> memref<1x!tpu.dma_semaphore, #tpu.memory_space<semaphore_mem>>
    %60 = tpu.memref_squeeze %59 : memref<1x!tpu.dma_semaphore, #tpu.memory_space<semaphore_mem>> -> memref<!tpu.dma_semaphore, #tpu.memory_space<semaphore_mem>>
    tpu.wait_dma2 semaphore(%60 : memref<!tpu.dma_semaphore, #tpu.memory_space<semaphore_mem>>) src(%57 : memref<1x768xf32, #tpu.memory_space<any>>) dst(%58 : memref<1x768xf32, #tpu.memory_space<vmem>>)
    %c1_i32_37 = arith.constant 1 : i32
    %c0_i32_38 = arith.constant 0 : i32
    %c0_i32_39 = arith.constant 0 : i32
    %61 = tpu.memref_slice %arg4[%c0_i32_38, %c0_i32_39] : memref<16x768xf32, #tpu.memory_space<any>> -> memref<1x768xf32, #tpu.memory_space<any>>
    %c1_i32_40 = arith.constant 1 : i32
    %c0_i32_41 = arith.constant 0 : i32
    %62 = tpu.memref_slice %arg6[%c1_i32_40, %c0_i32_41] : memref<8x768xf32, #tpu.memory_space<vmem>> -> memref<1x768xf32, #tpu.memory_space<vmem>>
    %63 = tpu.memref_slice %arg7[%c1_i32_37] : memref<8x!tpu.dma_semaphore, #tpu.memory_space<semaphore_mem>> -> memref<1x!tpu.dma_semaphore, #tpu.memory_space<semaphore_mem>>
    %64 = tpu.memref_squeeze %63 : memref<1x!tpu.dma_semaphore, #tpu.memory_space<semaphore_mem>> -> memref<!tpu.dma_semaphore, #tpu.memory_space<semaphore_mem>>
    tpu.wait_dma2 semaphore(%64 : memref<!tpu.dma_semaphore, #tpu.memory_space<semaphore_mem>>) src(%61 : memref<1x768xf32, #tpu.memory_space<any>>) dst(%62 : memref<1x768xf32, #tpu.memory_space<vmem>>)
    %c2_i32_42 = arith.constant 2 : i32
    %c0_i32_43 = arith.constant 0 : i32
    %c0_i32_44 = arith.constant 0 : i32
    %65 = tpu.memref_slice %arg4[%c0_i32_43, %c0_i32_44] : memref<16x768xf32, #tpu.memory_space<any>> -> memref<1x768xf32, #tpu.memory_space<any>>
    %c2_i32_45 = arith.constant 2 : i32
    %c0_i32_46 = arith.constant 0 : i32
    %66 = tpu.memref_slice %arg6[%c2_i32_45, %c0_i32_46] : memref<8x768xf32, #tpu.memory_space<vmem>> -> memref<1x768xf32, #tpu.memory_space<vmem>>
    %67 = tpu.memref_slice %arg7[%c2_i32_42] : memref<8x!tpu.dma_semaphore, #tpu.memory_space<semaphore_mem>> -> memref<1x!tpu.dma_semaphore, #tpu.memory_space<semaphore_mem>>
    %68 = tpu.memref_squeeze %67 : memref<1x!tpu.dma_semaphore, #tpu.memory_space<semaphore_mem>> -> memref<!tpu.dma_semaphore, #tpu.memory_space<semaphore_mem>>
    tpu.wait_dma2 semaphore(%68 : memref<!tpu.dma_semaphore, #tpu.memory_space<semaphore_mem>>) src(%65 : memref<1x768xf32, #tpu.memory_space<any>>) dst(%66 : memref<1x768xf32, #tpu.memory_space<vmem>>)
    %c3_i32_47 = arith.constant 3 : i32
    %c0_i32_48 = arith.constant 0 : i32
    %c0_i32_49 = arith.constant 0 : i32
    %69 = tpu.memref_slice %arg4[%c0_i32_48, %c0_i32_49] : memref<16x768xf32, #tpu.memory_space<any>> -> memref<1x768xf32, #tpu.memory_space<any>>
    %c3_i32_50 = arith.constant 3 : i32
    %c0_i32_51 = arith.constant 0 : i32
    %70 = tpu.memref_slice %arg6[%c3_i32_50, %c0_i32_51] : memref<8x768xf32, #tpu.memory_space<vmem>> -> memref<1x768xf32, #tpu.memory_space<vmem>>
    %71 = tpu.memref_slice %arg7[%c3_i32_47] : memref<8x!tpu.dma_semaphore, #tpu.memory_space<semaphore_mem>> -> memref<1x!tpu.dma_semaphore, #tpu.memory_space<semaphore_mem>>
    %72 = tpu.memref_squeeze %71 : memref<1x!tpu.dma_semaphore, #tpu.memory_space<semaphore_mem>> -> memref<!tpu.dma_semaphore, #tpu.memory_space<semaphore_mem>>
    tpu.wait_dma2 semaphore(%72 : memref<!tpu.dma_semaphore, #tpu.memory_space<semaphore_mem>>) src(%69 : memref<1x768xf32, #tpu.memory_space<any>>) dst(%70 : memref<1x768xf32, #tpu.memory_space<vmem>>)
    %c4_i32_52 = arith.constant 4 : i32
    %c0_i32_53 = arith.constant 0 : i32
    %c0_i32_54 = arith.constant 0 : i32
    %73 = tpu.memref_slice %arg4[%c0_i32_53, %c0_i32_54] : memref<16x768xf32, #tpu.memory_space<any>> -> memref<1x768xf32, #tpu.memory_space<any>>
    %c4_i32_55 = arith.constant 4 : i32
    %c0_i32_56 = arith.constant 0 : i32
    %74 = tpu.memref_slice %arg6[%c4_i32_55, %c0_i32_56] : memref<8x768xf32, #tpu.memory_space<vmem>> -> memref<1x768xf32, #tpu.memory_space<vmem>>
    %75 = tpu.memref_slice %arg7[%c4_i32_52] : memref<8x!tpu.dma_semaphore, #tpu.memory_space<semaphore_mem>> -> memref<1x!tpu.dma_semaphore, #tpu.memory_space<semaphore_mem>>
    %76 = tpu.memref_squeeze %75 : memref<1x!tpu.dma_semaphore, #tpu.memory_space<semaphore_mem>> -> memref<!tpu.dma_semaphore, #tpu.memory_space<semaphore_mem>>
    tpu.wait_dma2 semaphore(%76 : memref<!tpu.dma_semaphore, #tpu.memory_space<semaphore_mem>>) src(%73 : memref<1x768xf32, #tpu.memory_space<any>>) dst(%74 : memref<1x768xf32, #tpu.memory_space<vmem>>)
    %c5_i32_57 = arith.constant 5 : i32
    %c0_i32_58 = arith.constant 0 : i32
    %c0_i32_59 = arith.constant 0 : i32
    %77 = tpu.memref_slice %arg4[%c0_i32_58, %c0_i32_59] : memref<16x768xf32, #tpu.memory_space<any>> -> memref<1x768xf32, #tpu.memory_space<any>>
    %c5_i32_60 = arith.constant 5 : i32
    %c0_i32_61 = arith.constant 0 : i32
    %78 = tpu.memref_slice %arg6[%c5_i32_60, %c0_i32_61] : memref<8x768xf32, #tpu.memory_space<vmem>> -> memref<1x768xf32, #tpu.memory_space<vmem>>
    %79 = tpu.memref_slice %arg7[%c5_i32_57] : memref<8x!tpu.dma_semaphore, #tpu.memory_space<semaphore_mem>> -> memref<1x!tpu.dma_semaphore, #tpu.memory_space<semaphore_mem>>
    %80 = tpu.memref_squeeze %79 : memref<1x!tpu.dma_semaphore, #tpu.memory_space<semaphore_mem>> -> memref<!tpu.dma_semaphore, #tpu.memory_space<semaphore_mem>>
    tpu.wait_dma2 semaphore(%80 : memref<!tpu.dma_semaphore, #tpu.memory_space<semaphore_mem>>) src(%77 : memref<1x768xf32, #tpu.memory_space<any>>) dst(%78 : memref<1x768xf32, #tpu.memory_space<vmem>>)
    %c6_i32_62 = arith.constant 6 : i32
    %c0_i32_63 = arith.constant 0 : i32
    %c0_i32_64 = arith.constant 0 : i32
    %81 = tpu.memref_slice %arg4[%c0_i32_63, %c0_i32_64] : memref<16x768xf32, #tpu.memory_space<any>> -> memref<1x768xf32, #tpu.memory_space<any>>
    %c6_i32_65 = arith.constant 6 : i32
    %c0_i32_66 = arith.constant 0 : i32
    %82 = tpu.memref_slice %arg6[%c6_i32_65, %c0_i32_66] : memref<8x768xf32, #tpu.memory_space<vmem>> -> memref<1x768xf32, #tpu.memory_space<vmem>>
    %83 = tpu.memref_slice %arg7[%c6_i32_62] : memref<8x!tpu.dma_semaphore, #tpu.memory_space<semaphore_mem>> -> memref<1x!tpu.dma_semaphore, #tpu.memory_space<semaphore_mem>>
    %84 = tpu.memref_squeeze %83 : memref<1x!tpu.dma_semaphore, #tpu.memory_space<semaphore_mem>> -> memref<!tpu.dma_semaphore, #tpu.memory_space<semaphore_mem>>
    tpu.wait_dma2 semaphore(%84 : memref<!tpu.dma_semaphore, #tpu.memory_space<semaphore_mem>>) src(%81 : memref<1x768xf32, #tpu.memory_space<any>>) dst(%82 : memref<1x768xf32, #tpu.memory_space<vmem>>)
    %c7_i32_67 = arith.constant 7 : i32
    %c0_i32_68 = arith.constant 0 : i32
    %c0_i32_69 = arith.constant 0 : i32
    %85 = tpu.memref_slice %arg4[%c0_i32_68, %c0_i32_69] : memref<16x768xf32, #tpu.memory_space<any>> -> memref<1x768xf32, #tpu.memory_space<any>>
    %c7_i32_70 = arith.constant 7 : i32
    %c0_i32_71 = arith.constant 0 : i32
    %86 = tpu.memref_slice %arg6[%c7_i32_70, %c0_i32_71] : memref<8x768xf32, #tpu.memory_space<vmem>> -> memref<1x768xf32, #tpu.memory_space<vmem>>
    %87 = tpu.memref_slice %arg7[%c7_i32_67] : memref<8x!tpu.dma_semaphore, #tpu.memory_space<semaphore_mem>> -> memref<1x!tpu.dma_semaphore, #tpu.memory_space<semaphore_mem>>
    %88 = tpu.memref_squeeze %87 : memref<1x!tpu.dma_semaphore, #tpu.memory_space<semaphore_mem>> -> memref<!tpu.dma_semaphore, #tpu.memory_space<semaphore_mem>>
    tpu.wait_dma2 semaphore(%88 : memref<!tpu.dma_semaphore, #tpu.memory_space<semaphore_mem>>) src(%85 : memref<1x768xf32, #tpu.memory_space<any>>) dst(%86 : memref<1x768xf32, #tpu.memory_space<vmem>>)
    %c0 = arith.constant 0 : index
    %c0_72 = arith.constant 0 : index
    %89 = vector.load %arg3[%c0, %c0_72] : memref<8x1xf32, #tpu.memory_space<vmem>>, vector<8x1xf32>
    %c0_73 = arith.constant 0 : index
    %c0_74 = arith.constant 0 : index
    %90 = vector.load %arg2[%c0_73, %c0_74] : memref<8x768xf32, #tpu.memory_space<vmem>>, vector<8x768xf32>
    %c0_75 = arith.constant 0 : index
    %c0_76 = arith.constant 0 : index
    %91 = vector.load %arg6[%c0_75, %c0_76] : memref<8x768xf32, #tpu.memory_space<vmem>>, vector<8x768xf32>
    %cst = arith.constant 1.000000e+00 : f32
    %92 = vector.broadcast %cst : f32 to vector<8x1xf32>
    %93 = arith.subf %92, %89 : vector<8x1xf32>
    %94 = vector.broadcast %93 : vector<8x1xf32> to vector<8x768xf32>
    %95 = arith.mulf %94, %90 : vector<8x768xf32>
    %96 = vector.broadcast %89 : vector<8x1xf32> to vector<8x768xf32>
    %97 = arith.mulf %96, %91 : vector<8x768xf32>
    %98 = arith.addf %95, %97 : vector<8x768xf32>
    %c0_77 = arith.constant 0 : index
    %c0_78 = arith.constant 0 : index
    %99 = vector.load %arg5[%c0_77, %c0_78] : memref<8x768xf32, #tpu.memory_space<vmem>>, vector<8x768xf32>
    tpu.vector_store %arg5[%c0_77, %c0_78], %98 {strides = array<i32>} : memref<8x768xf32, #tpu.memory_space<vmem>>, vector<8x768xf32>,
    return
  }
  func.func @transform_0(%arg0: i32, %arg1: memref<16xi32, #tpu.memory_space<smem>>) -> (i32, i32) {
    %c0_i32 = arith.constant 0 : i32
    %c0_i32_0 = arith.constant 0 : i32
    return %arg0, %c0_i32 : i32, i32
  }
  func.func @transform_1(%arg0: i32, %arg1: memref<16xi32, #tpu.memory_space<smem>>) -> (i32, i32) {
    %c0_i32 = arith.constant 0 : i32
    %c0_i32_0 = arith.constant 0 : i32
    return %arg0, %c0_i32 : i32, i32
  }
  func.func @transform_3(%arg0: i32, %arg1: memref<16xi32, #tpu.memory_space<smem>>) -> (i32, i32) {
    %c0_i32 = arith.constant 0 : i32
    %c0_i32_0 = arith.constant 0 : i32
    return %arg0, %c0_i32 : i32, i32
  }
}

</mosaic_0001>

<llo_original>
// kernel: tpu_custom_call.1
$region0: #{tpu_custom_call.1}
  #allocation0 [shape = 'u32[]', space=smem, size = 0x4, offset = 0x4, fixed_abs, tag = 'smem constant byte address 0x4 - core index']
  #allocation1 [shape = 'u32[144,128]{1,0:T(1,128)}', space=vmem, size = 0x12000, scoped, tag = 'internal scratch']
  #allocation2 [shape = 'f32[8,768]{1,0:T(8,128)}', space=vmem, size = 0x6000, scoped, tag = 'scratch operand']
  #allocation3 [shape = 's32[8]{0}', space=sflag, size = 0x20, scoped, tag = 'scratch operand']
  #allocation4 [shape = 's32[1]{0}', space=sflag, size = 0x4, scoped, tag = 'scoped memory for tpu_custom_call.1']
  #allocation5 [shape = 'u8[512]{0}', space=smem, size = 0x200, scoped, tag = 'prefetched SMEM operand 0']
  #allocation10 [shape = 's32[]', space=sflag, size = 0x4, offset = 0, fixed_abs, tag = 'sflag constant byte address 0x0 - dummy sync flag']
  #allocation11 [shape = 's32[]', space=sflag, size = 0x4, offset = 0, fixed_abs, tag = 'sflag constant byte address 0x0 - dummy sync flag']
  #allocation12 [shape = 's32[]', space=sflag, size = 0x4, offset = 0, fixed_abs, tag = 'sflag constant byte address 0x0 - dummy sync flag']
  #allocation13 [shape = 's32[]', space=sflag, size = 0x4, offset = 0, fixed_abs, tag = 'sflag constant byte address 0x0 - dummy sync flag']
  #allocation14 [shape = 's32[]', space=sflag, size = 0x4, offset = 0, fixed_abs, tag = 'sflag constant byte address 0x0 - dummy sync flag']
  #allocation15 [shape = 's32[]', space=sflag, size = 0x4, offset = 0, fixed_abs, tag = 'sflag constant byte address 0x0 - dummy sync flag']
  #allocation16 [shape = 's32[]', space=sflag, size = 0x4, offset = 0, fixed_abs, tag = 'sflag constant byte address 0x0 - dummy sync flag']
  #allocation17 [shape = 's32[]', space=sflag, size = 0x4, offset = 0, fixed_abs, tag = 'sflag constant byte address 0x0 - dummy sync flag']
  %s0 = inlined_call_operand.vmem [shape: s32[16], index: 0, kind: input, shape index: {}]
  %s1 = inlined_call_operand.hbm [shape: f32[16,768], index: 1, kind: input, shape index: {}]
  %s2 = inlined_call_operand.vmem [shape: f32[16,1], index: 2, kind: input, shape index: {}]
  %s3 = inlined_call_operand.hbm [shape: f32[16,768], index: 3, kind: input, shape index: {}]
  %s4 = inlined_call_operand.hbm [shape: f32[16,768], index: 4, kind: output, shape index: {}]
  %s5 = sld [smem:[#allocation0]]
  $region45: #{tpu_custom_call.1} parent=0
    _
  %s7 = ssub.s32 1, %s5
  %s8 = scalar_select 0, %s7, %s5
  %s9 = sshll.u32 %s0, 4
  %s10 = int_to_ptr.vmem [resolvable:$true] %s9
  %12 = dma.vmem_to_smem %s10, 16, [#allocation5], [#allocation4]
  %13 = dma.done [#allocation4], 16
  %14 = sfence
  $region1: #{tpu_custom_call.1} parent=0
    #allocation6 [shape = 'u8[49152]{0}', space=vmem, size = 0xc000, scoped, tag = 'input window, operand 1']
    #allocation7 [shape = 's32[2]{0}', space=sflag, size = 0x8, scoped, tag = 'scoped memory for tpu_custom_call.1']
    #allocation8 [shape = 's32[2]{0}', space=sflag, size = 0x8, scoped, tag = 'scoped memory for tpu_custom_call.1']
    #allocation9 [shape = 'u8[49152]{0}', space=vmem, size = 0xc000, scoped, tag = 'output window, operand 0']
    %15 = vsyncpa [#allocation7], 0
    %s16 = scalar_lea.sflag [#allocation7], 1
    %17 = vsyncpa %s16, 0
    %18 = vsyncpa [#allocation8], 0
    %s19 = scalar_lea.sflag [#allocation8], 1
    %20 = vsyncpa %s19, 0
    loop: start=0, step=1, limit=4
    $region2: #{tpu_custom_call.1} parent=1 // loop_pre_header
      _
    $region3: #{tpu_custom_call.1} parent=1 // loop_header
      %s22 = sphi 0, %s26
      %p23 = scmp.ge.s32.totalorder %s22, 4
      %s32 = sphi 0, %s34
      %s35 = sphi 0, %s32
      %s36 = sphi 0, %s35
      %s52 = sphi 0, %s36
      %s58 = sphi 0, %s60
      %s61 = sphi 0, %s58
      %s62 = sphi 0, %s61
      %s78 = sphi 0, %s62
      %s84 = sphi 0, %s86
      %s87 = sphi 0, %s84
      %s88 = sphi 0, %s87
      %s104 = sphi 0, %s88
    $region4: #{tpu_custom_call.1} parent=1 // loop_header_branch
      %25 = sbr.rel (%p23) target = $region8
    $region5: #{tpu_custom_call.1} parent=1 // loop_body
      %s27 = ssub.s32 %s22, 1
      %s28 = ssub.s32 %s22, 2
      %s29 = sadd.s32 %s22, 1
      %s30 = ssub.s32 %s22, %s29
      %p31 = scmp.eq.s32.totalorder %s30, 0
      %s33 = sadd.s32 %s32, 1
      %s34 = scalar_select %p31, %s32, %s33
      %p37 = pneg %p31
      %p38 = scmp.eq.s32.totalorder %s22, 1
      %p39 = por %p37, %p38
      %p40 = scmp.ne.s32.totalorder %s32, %s35
      %p41 = scmp.eq.s32.totalorder %s22, 0
      %p42 = por %p40, %p41
      %p43 = scmp.ne.s32.totalorder %s32, %s35
      %p44 = scmp.eq.s32.totalorder %s27, 1
      %p45 = por %p43, %p44
      %p46 = scmp.ne.s32.totalorder %s35, %s36
      %p47 = scmp.eq.s32.totalorder %s27, 0
      %p48 = por %p46, %p47
      %p49 = scmp.ne.s32.totalorder %s35, %s36
      %p50 = scmp.eq.s32.totalorder %s28, 1
      %p51 = por %p49, %p50
      %p53 = scmp.ne.s32.totalorder %s36, %s52
      %p54 = scmp.eq.s32.totalorder %s28, 0
      %p55 = por %p53, %p54
      %s56 = ssub.s32 %s22, %s29
      %p57 = scmp.eq.s32.totalorder %s56, 0
      %s59 = sadd.s32 %s58, 1
      %s60 = scalar_select %p57, %s58, %s59
      %p63 = pneg %p57
      %p64 = scmp.eq.s32.totalorder %s22, 1
      %p65 = por %p63, %p64
      %p66 = scmp.ne.s32.totalorder %s58, %s61
      %p67 = scmp.eq.s32.totalorder %s22, 0
      %p68 = por %p66, %p67
      %p69 = scmp.ne.s32.totalorder %s58, %s61
      %p70 = scmp.eq.s32.totalorder %s27, 1
      %p71 = por %p69, %p70
      %p72 = scmp.ne.s32.totalorder %s61, %s62
      %p73 = scmp.eq.s32.totalorder %s27, 0
      %p74 = por %p72, %p73
      %p75 = scmp.ne.s32.totalorder %s61, %s62
      %p76 = scmp.eq.s32.totalorder %s28, 1
      %p77 = por %p75, %p76
      %p79 = scmp.ne.s32.totalorder %s62, %s78
      %p80 = scmp.eq.s32.totalorder %s28, 0
      %p81 = por %p79, %p80
      %s82 = ssub.s32 %s22, %s29
      %p83 = scmp.eq.s32.totalorder %s82, 0
      %s85 = sadd.s32 %s84, 1
      %s86 = scalar_select %p83, %s84, %s85
      %p89 = pneg %p83
      %p90 = scmp.eq.s32.totalorder %s22, 1
      %p91 = por %p89, %p90
      %p92 = scmp.ne.s32.totalorder %s84, %s87
      %p93 = scmp.eq.s32.totalorder %s22, 0
      %p94 = por %p92, %p93
      %p95 = scmp.ne.s32.totalorder %s84, %s87
      %p96 = scmp.eq.s32.totalorder %s27, 1
      %p97 = por %p95, %p96
      %p98 = scmp.ne.s32.totalorder %s87, %s88
      %p99 = scmp.eq.s32.totalorder %s27, 0
      %p100 = por %p98, %p99
      %p101 = scmp.ne.s32.totalorder %s87, %s88
      %p102 = scmp.eq.s32.totalorder %s28, 1
      %p103 = por %p101, %p102
      %p105 = scmp.ne.s32.totalorder %s88, %s104
      %p106 = scmp.eq.s32.totalorder %s28, 0
      %p107 = por %p105, %p106
      %p108 = scmp.le.s32.totalorder 1, %s22
      %p109 = scmp.lt.s32.totalorder %s22, 3
      %p110 = pnand %p108, %p109
      %p111 = pneg %p110
      // Predicated region
      $region9: #{tpu_custom_call.1} parent=5 // pred_check
        _
      $region10: #{tpu_custom_call.1} parent=5 // pred_check_branch
        %113 = sbr.rel (%p110) target = $region12
      $region11: #{tpu_custom_call.1} parent=5 // pred_region
        %s114 = ssub.s32 %s22, 1
      $region12: #{tpu_custom_call.1} parent=5 // pred_fallthru
        _
      %p115 = scmp.lt.s32.totalorder %s22, 2
      // Predicated region
      $region13: #{tpu_custom_call.1} parent=5 // pred_check
        %p116 = pneg %p115
      $region14: #{tpu_custom_call.1} parent=5 // pred_check_branch
        %118 = sbr.rel (%p116) target = $region16
      $region15: #{tpu_custom_call.1} parent=5 // pred_region
        // Predicated region
        $region17: #{tpu_custom_call.1} parent=15 // pred_check
          %p119 = pneg %p42
        $region18: #{tpu_custom_call.1} parent=15 // pred_check_branch
          %121 = sbr.rel (%p119) target = $region20
        $region19: #{tpu_custom_call.1} parent=15 // pred_region
          %s122 = sand.u32 %s32, 1
          %s123 = scalar_lea.sflag [#allocation7], %s122
          %s124 = sand.u32 %s32, 1
          %s125 = smul.addr %s124, 48
          %s126 = scalar_lea.vmem [#allocation6], %s125
          %s128 = ssub.s32 768, 768
          %129 = vsyncadd %s123, %s128
          %s130 = smul.addr %s22, 6
          %s131 = smul.addr %s130, 128
          %s132 = scalar_lea.hbm %s1, %s131
          %s134 = sshll.u32 %s126, 4
          %s135 = int_to_ptr.vmem [resolvable:$true] %s134
          %137 = dma.hbm_to_vmem [thread:$0]  %s132, 768, %s135, %s123
        $region20: #{tpu_custom_call.1} parent=15 // pred_fallthru
          _
        // Predicated region
        $region21: #{tpu_custom_call.1} parent=15 // pred_check
          %p138 = pneg %p68
        $region22: #{tpu_custom_call.1} parent=15 // pred_check_branch
          %140 = sbr.rel (%p138) target = $region24
        $region23: #{tpu_custom_call.1} parent=15 // pred_region
          %p141 = scmp.lt.s32.totalorder %s22, 1
          %s142 = scalar_select %p141, %s22, 1
          %s143 = smul.addr %s142, 8
          %s144 = scalar_lea.vmem %s2, %s143
        $region24: #{tpu_custom_call.1} parent=15 // pred_fallthru
          _
      $region16: #{tpu_custom_call.1} parent=5 // pred_fallthru
        _
      %p145 = scmp.le.s32.totalorder 1, %s22
      %p146 = scmp.lt.s32.totalorder %s22, 3
      %p147 = pnand %p145, %p146
      %p148 = pneg %p147
      // Predicated region
      $region25: #{tpu_custom_call.1} parent=5 // pred_check
        _
      $region26: #{tpu_custom_call.1} parent=5 // pred_check_branch
        %150 = sbr.rel (%p147) target = $region28
      $region27: #{tpu_custom_call.1} parent=5 // pred_region
        %s151 = ssub.s32 %s22, 1
        %s152 = sand.u32 %s35, 1
        %s153 = scalar_lea.sflag [#allocation7], %s152
        %s154 = sand.u32 %s35, 1
        %s155 = smul.addr %s154, 48
        %s156 = scalar_lea.vmem [#allocation6], %s155
        // Predicated region
        $region29: #{tpu_custom_call.1} parent=27 // pred_check
          %p157 = pneg %p48
        $region30: #{tpu_custom_call.1} parent=27 // pred_check_branch
          %159 = sbr.rel (%p157) target = $region32
        $region31: #{tpu_custom_call.1} parent=27 // pred_region
          %160 = dma.done %s153, 768
        $region32: #{tpu_custom_call.1} parent=27 // pred_fallthru
          _
        %s161 = sand.u32 %s35, 1
        %s162 = scalar_lea.sflag [#allocation7], %s161
        %s163 = sand.u32 %s35, 1
        %s164 = smul.addr %s163, 48
        %s165 = scalar_lea.vmem [#allocation6], %s164
        %p166 = pneg %p48
        %p167 = pneg %p45
        %p168 = scmp.lt.s32.totalorder %s27, 1
        %s169 = scalar_select %p168, %s27, 1
        %s170 = smul.addr %s169, 8
        %s171 = scalar_lea.vmem %s2, %s170
        %p172 = pneg %p74
        %p173 = pneg %p71
        %p174 = pneg %p100
        %p175 = pneg %p97
        %s176 = sand.u32 %s87, 1
        %s177 = scalar_lea.sflag [#allocation8], %s176
        %s178 = sand.u32 %s87, 1
        %s179 = smul.addr %s178, 48
        %s180 = scalar_lea.vmem [#allocation9], %s179
        %p181 = scmp.lt.s32.totalorder %s27, 1
        %s182 = scalar_select %p181, %s27, 1
        %s183 = smul.addr %s182, 8
        %s184 = scalar_lea.vmem %s2, %s183
        %s185 = smul.u32 %s27, 8
        %s186 = sld [smem:[#allocation5 + %s185]]
        %s187 = sshrl.u32 %s186, 3
        %s188 = sand.u32 %s186, 7
        %s189 = smul.u32 %s187, 48
        %s190 = sadd.s32 %s188, %s189
        %s191 = smul.addr %s190, 16
        %s192 = scalar_lea.hbm %s3, %s191
        %s194 = sshll.u32 [#allocation2], 4
        %s195 = int_to_ptr.vmem [resolvable:$true] %s194
        %197 = dma.hbm_to_vmem [thread:$0]  %s192, 96, %s195, [#allocation3], 128, 128, 1
        %s198 = sadd.s32 %s185, 1
        %s199 = sld [smem:[#allocation5 + %s198]]
        %s200 = sshrl.u32 %s199, 3
        %s201 = sand.u32 %s199, 7
        %s202 = smul.u32 %s200, 48
        %s203 = sadd.s32 %s201, %s202
        %s204 = smul.addr %s203, 16
        %s205 = scalar_lea.hbm %s3, %s204
        %s206 = scalar_lea.vmem [#allocation2], 1
        %s207 = scalar_lea.sflag [#allocation3], 1
        %s209 = sshll.u32 %s206, 4
        %s210 = int_to_ptr.vmem [resolvable:$true] %s209
        %212 = dma.hbm_to_vmem [thread:$0]  %s205, 96, %s210, %s207, 128, 128, 1
        %s213 = sadd.s32 %s185, 2
        %s214 = sld [smem:[#allocation5 + %s213]]
        %s215 = sshrl.u32 %s214, 3
        %s216 = sand.u32 %s214, 7
        %s217 = smul.u32 %s215, 48
        %s218 = sadd.s32 %s216, %s217
        %s219 = smul.addr %s218, 16
        %s220 = scalar_lea.hbm %s3, %s219
        %s221 = scalar_lea.vmem [#allocation2], 2
        %s222 = scalar_lea.sflag [#allocation3], 2
        %s224 = sshll.u32 %s221, 4
        %s225 = int_to_ptr.vmem [resolvable:$true] %s224
        %227 = dma.hbm_to_vmem [thread:$0]  %s220, 96, %s225, %s222, 128, 128, 1
        %s228 = sadd.s32 %s185, 3
        %s229 = sld [smem:[#allocation5 + %s228]]
        %s230 = sshrl.u32 %s229, 3
        %s231 = sand.u32 %s229, 7
        %s232 = smul.u32 %s230, 48
        %s233 = sadd.s32 %s231, %s232
        %s234 = smul.addr %s233, 16
        %s235 = scalar_lea.hbm %s3, %s234
        %s236 = scalar_lea.vmem [#allocation2], 3
        %s237 = scalar_lea.sflag [#allocation3], 3
        %s239 = sshll.u32 %s236, 4
        %s240 = int_to_ptr.vmem [resolvable:$true] %s239
        %242 = dma.hbm_to_vmem [thread:$0]  %s235, 96, %s240, %s237, 128, 128, 1
        %s243 = sadd.s32 %s185, 4
        %s244 = sld [smem:[#allocation5 + %s243]]
        %s245 = sshrl.u32 %s244, 3
        %s246 = sand.u32 %s244, 7
        %s247 = smul.u32 %s245, 48
        %s248 = sadd.s32 %s246, %s247
        %s249 = smul.addr %s248, 16
        %s250 = scalar_lea.hbm %s3, %s249
        %s251 = scalar_lea.vmem [#allocation2], 4
        %s252 = scalar_lea.sflag [#allocation3], 4
        %s254 = sshll.u32 %s251, 4
        %s255 = int_to_ptr.vmem [resolvable:$true] %s254
        %257 = dma.hbm_to_vmem [thread:$0]  %s250, 96, %s255, %s252, 128, 128, 1
        %s258 = sadd.s32 %s185, 5
        %s259 = sld [smem:[#allocation5 + %s258]]
        %s260 = sshrl.u32 %s259, 3
        %s261 = sand.u32 %s259, 7
        %s262 = smul.u32 %s260, 48
        %s263 = sadd.s32 %s261, %s262
        %s264 = smul.addr %s263, 16
        %s265 = scalar_lea.hbm %s3, %s264
        %s266 = scalar_lea.vmem [#allocation2], 5
        %s267 = scalar_lea.sflag [#allocation3], 5
        %s269 = sshll.u32 %s266, 4
        %s270 = int_to_ptr.vmem [resolvable:$true] %s269
        %272 = dma.hbm_to_vmem [thread:$0]  %s265, 96, %s270, %s267, 128, 128, 1
        %s273 = sadd.s32 %s185, 6
        %s274 = sld [smem:[#allocation5 + %s273]]
        %s275 = sshrl.u32 %s274, 3
        %s276 = sand.u32 %s274, 7
        %s277 = smul.u32 %s275, 48
        %s278 = sadd.s32 %s276, %s277
        %s279 = smul.addr %s278, 16
        %s280 = scalar_lea.hbm %s3, %s279
        %s281 = scalar_lea.vmem [#allocation2], 6
        %s282 = scalar_lea.sflag [#allocation3], 6
        %s284 = sshll.u32 %s281, 4
        %s285 = int_to_ptr.vmem [resolvable:$true] %s284
        %287 = dma.hbm_to_vmem [thread:$0]  %s280, 96, %s285, %s282, 128, 128, 1
        %s288 = sadd.s32 %s185, 7
        %s289 = sld [smem:[#allocation5 + %s288]]
        %s290 = sshrl.u32 %s289, 3
        %s291 = sand.u32 %s289, 7
        %s292 = smul.u32 %s290, 48
        %s293 = sadd.s32 %s291, %s292
        %s294 = smul.addr %s293, 16
        %s295 = scalar_lea.hbm %s3, %s294
        %s296 = scalar_lea.vmem [#allocation2], 7
        %s297 = scalar_lea.sflag [#allocation3], 7
        %s299 = sshll.u32 %s296, 4
        %s300 = int_to_ptr.vmem [resolvable:$true] %s299
        %302 = dma.hbm_to_vmem [thread:$0]  %s295, 96, %s300, %s297, 128, 128, 1
        %s303 = smul.u32 1, 6
        %s304 = sshll.u32 %s303, 4
        %305 = dma.done [#allocation3], %s304
        %s306 = sshll.u32 %s303, 4
        %307 = dma.done %s207, %s306
        %s308 = sshll.u32 %s303, 4
        %309 = dma.done %s222, %s308
        %s310 = sshll.u32 %s303, 4
        %311 = dma.done %s237, %s310
        %s312 = sshll.u32 %s303, 4
        %313 = dma.done %s252, %s312
        %s314 = sshll.u32 %s303, 4
        %315 = dma.done %s267, %s314
        %s316 = sshll.u32 %s303, 4
        %317 = dma.done %s282, %s316
        %s318 = sshll.u32 %s303, 4
        %319 = dma.done %s297, %s318
        %v320 = vld [vmem:[%s184] sm:$0xff]
        %v321 = vld [vmem:[%s156] sm:$0xff]
        %v322 = vld [vmem:[%s156 + $0x8] sm:$0xff]
        %v323 = vld [vmem:[%s156 + $0x10] sm:$0xff]
        %v324 = vld [vmem:[%s156 + $0x18] sm:$0xff]
        %v325 = vld [vmem:[%s156 + $0x20] sm:$0xff]
        %v326 = vld [vmem:[%s156 + $0x28] sm:$0xff]
        %v327 = vld [vmem:[#allocation2] sm:$0xff]
        %v328 = vld [vmem:[#allocation2 + $0x8] sm:$0xff]
        %v329 = vld [vmem:[#allocation2 + $0x10] sm:$0xff]
        %v330 = vld [vmem:[#allocation2 + $0x18] sm:$0xff]
        %v331 = vld [vmem:[#allocation2 + $0x20] sm:$0xff]
        %v332 = vld [vmem:[#allocation2 + $0x28] sm:$0xff]
        %v333 = vsub.f32 1.0, %v320
        %335 = vset.pattern.permute.xlu0 0
        %336 = vperm.xlu0 %335, %v333
        %v337 = vpop.permute.xlu0 %336
        %v339 = vmul.f32 %v337, %v321
        %v340 = vmul.f32 %v337, %v322
        %v341 = vmul.f32 %v337, %v323
        %v342 = vmul.f32 %v337, %v324
        %v343 = vmul.f32 %v337, %v325
        %v344 = vmul.f32 %v337, %v326
        %346 = vset.pattern.permute.xlu0 0
        %347 = vperm.xlu0 %346, %v320
        %v348 = vpop.permute.xlu0 %347
        %v350 = vmul.f32 %v348, %v327
        %v351 = vmul.f32 %v348, %v328
        %v352 = vmul.f32 %v348, %v329
        %v353 = vmul.f32 %v348, %v330
        %v354 = vmul.f32 %v348, %v331
        %v355 = vmul.f32 %v348, %v332
        %v356 = vadd.f32 %v339, %v350
        %v357 = vadd.f32 %v340, %v351
        %v358 = vadd.f32 %v341, %v352
        %v359 = vadd.f32 %v342, %v353
        %v360 = vadd.f32 %v343, %v354
        %v361 = vadd.f32 %v344, %v355
        %362 = vst [vmem:[%s180] sm:$0xff] %v356
        %363 = vst [vmem:[%s180 + $0x8] sm:$0xff] %v357
        %364 = vst [vmem:[%s180 + $0x10] sm:$0xff] %v358
        %365 = vst [vmem:[%s180 + $0x18] sm:$0xff] %v359
        %366 = vst [vmem:[%s180 + $0x20] sm:$0xff] %v360
        %367 = vst [vmem:[%s180 + $0x28] sm:$0xff] %v361
        %s368 = sand.u32 %s87, 1
        %s369 = scalar_lea.sflag [#allocation8], %s368
        %s370 = sand.u32 %s87, 1
        %s371 = smul.addr %s370, 48
        %s372 = scalar_lea.vmem [#allocation9], %s371
        // Predicated region
        $region33: #{tpu_custom_call.1} parent=27 // pred_check
          %p373 = pneg %p97
        $region34: #{tpu_custom_call.1} parent=27 // pred_check_branch
          %375 = sbr.rel (%p373) target = $region36
        $region35: #{tpu_custom_call.1} parent=27 // pred_region
          %s377 = ssub.s32 768, 768
          %378 = vsyncadd %s369, %s377
          %s379 = smul.addr %s27, 6
          %s380 = smul.addr %s379, 128
          %s381 = scalar_lea.hbm %s4, %s380
          %s383 = sshll.u32 %s372, 4
          %s384 = int_to_ptr.vmem [resolvable:$true] %s383
          %386 = dma.vmem_to_hbm [thread:$0]  %s384, 768, %s381, %s369
        $region36: #{tpu_custom_call.1} parent=27 // pred_fallthru
          _
      $region28: #{tpu_custom_call.1} parent=5 // pred_fallthru
        _
      %p387 = scmp.le.s32.totalorder 2, %s22
      // Predicated region
      $region37: #{tpu_custom_call.1} parent=5 // pred_check
        %p388 = pneg %p387
      $region38: #{tpu_custom_call.1} parent=5 // pred_check_branch
        %390 = sbr.rel (%p388) target = $region40
      $region39: #{tpu_custom_call.1} parent=5 // pred_region
        %s391 = ssub.s32 %s22, 2
        // Predicated region
        $region41: #{tpu_custom_call.1} parent=39 // pred_check
          %p392 = pneg %p103
        $region42: #{tpu_custom_call.1} parent=39 // pred_check_branch
          %394 = sbr.rel (%p392) target = $region44
        $region43: #{tpu_custom_call.1} parent=39 // pred_region
          %s395 = sand.u32 %s88, 1
          %s396 = scalar_lea.sflag [#allocation8], %s395
          %s397 = sand.u32 %s88, 1
          %s398 = smul.addr %s397, 48
          %s399 = scalar_lea.vmem [#allocation9], %s398
          %400 = dma.done %s396, 768
        $region44: #{tpu_custom_call.1} parent=39 // pred_fallthru
          _
      $region40: #{tpu_custom_call.1} parent=5 // pred_fallthru
        _
    $region6: #{tpu_custom_call.1} parent=1 // loop_footer
      %s26 = sadd.s32 1, %s22
    $region7: #{tpu_custom_call.1} parent=1 // loop_footer_branch
      %21 = sbr.rel target = $region3
    $region8: #{tpu_custom_call.1} parent=1 // loop_exit
      _
    %401 = vsyncpa [#allocation7], 1
    %s402 = scalar_lea.sflag [#allocation7], 1
    %403 = vsyncpa %s402, 1
    %404 = vsyncpa [#allocation8], 1
    %s405 = scalar_lea.sflag [#allocation8], 1
    %406 = vsyncpa %s405, 1
  %407 = vsyncmov [#allocation3]
  %s408 = vpop.sfrf %407
  %p409 = scmp.eq.s32.totalorder %s408, 0
  %p410 = pneg %p409
  %412 = shalt.err (%p410)
  %s413 = scalar_lea.sflag [#allocation3], 1
  %414 = vsyncmov %s413
  %s415 = vpop.sfrf %414
  %p416 = scmp.eq.s32.totalorder %s415, 0
  %p417 = pneg %p416
  %419 = shalt.err (%p417)
  %s420 = scalar_lea.sflag [#allocation3], 2
  %421 = vsyncmov %s420
  %s422 = vpop.sfrf %421
  %p423 = scmp.eq.s32.totalorder %s422, 0
  %p424 = pneg %p423
  %426 = shalt.err (%p424)
  %s427 = scalar_lea.sflag [#allocation3], 3
  %428 = vsyncmov %s427
  %s429 = vpop.sfrf %428
  %p430 = scmp.eq.s32.totalorder %s429, 0
  %p431 = pneg %p430
  %433 = shalt.err (%p431)
  %s434 = scalar_lea.sflag [#allocation3], 4
  %435 = vsyncmov %s434
  %s436 = vpop.sfrf %435
  %p437 = scmp.eq.s32.totalorder %s436, 0
  %p438 = pneg %p437
  %440 = shalt.err (%p438)
  %s441 = scalar_lea.sflag [#allocation3], 5
  %442 = vsyncmov %s441
  %s443 = vpop.sfrf %442
  %p444 = scmp.eq.s32.totalorder %s443, 0
  %p445 = pneg %p444
  %447 = shalt.err (%p445)
  %s448 = scalar_lea.sflag [#allocation3], 6
  %449 = vsyncmov %s448
  %s450 = vpop.sfrf %449
  %p451 = scmp.eq.s32.totalorder %s450, 0
  %p452 = pneg %p451
  %454 = shalt.err (%p452)
  %s455 = scalar_lea.sflag [#allocation3], 7
  %456 = vsyncmov %s455
  %s457 = vpop.sfrf %456
  %p458 = scmp.eq.s32.totalorder %s457, 0
  %p459 = pneg %p458
  %461 = shalt.err (%p459)

</llo_original>
